<compile_context>
chip_gen: v7x
topology: tpu7x:2x2x1
jax: 0.10.0
libtpu: 0.0.40
codegen_flags: <defaults>
</compile_context>

<pallas_src>
import math
import functools

import jax
import jax.numpy as jnp
from jax.experimental import pallas as pl
from jax.experimental.pallas import tpu as pltpu


def _round_up(x: int, m: int) -> int:
    return ((x + m - 1) // m) * m


# ----------------------- Path A: full-K, resident weight -----------------------

def _equal_linear_kernel_fullk(x_ref, w_ref, b_ref, o_ref, *,
                               scale, lr_mul, activation, neg_slope, act_gain):
    # x_ref: (tm, K), w_ref: (K, N), b_ref: (1, N), o_ref: (tm, N)
    out = jnp.dot(x_ref[...], w_ref[...], preferred_element_type=jnp.float32)
    out = out * scale + b_ref[...].astype(jnp.float32) * lr_mul
    if activation:
        # fused_leaky_relu: gain folded into the select -> select + 1 mul.
        out = out * jnp.where(out >= 0.0, act_gain, neg_slope * act_gain)
    o_ref[...] = out.astype(o_ref.dtype)


# ----------------------- Path B: K-tiled accumulator fallback ------------------

def _equal_linear_kernel_ktiled(x_ref, w_ref, b_ref, o_ref, acc_ref, *,
                                scale, lr_mul, activation, neg_slope, act_gain):
    # x_ref: (tm, tk), w_ref: (tk, tn), b_ref: (1, tn), o_ref/acc_ref: (tm, tn)
    k = pl.program_id(2)

    @pl.when(k == 0)
    def _():
        acc_ref[...] = jnp.zeros_like(acc_ref)

    acc_ref[...] += jnp.dot(x_ref[...], w_ref[...],
                            preferred_element_type=jnp.float32)

    @pl.when(k == pl.num_programs(2) - 1)
    def _():
        out = acc_ref[...] * scale + b_ref[...].astype(jnp.float32) * lr_mul
        if activation:
            out = out * jnp.where(out >= 0.0, act_gain, neg_slope * act_gain)
        o_ref[...] = out.astype(o_ref.dtype)


# ------------------------------- wrapper ---------------------------------------

_VMEM_LIMIT_BYTES = 32 * 1024 * 1024     # safe on v5e/v6e/v7x (>= default on all)
_W_RESIDENT_BUDGET = 12 * 1024 * 1024    # double-buffered resident weight budget
_XO_BLOCK_BUDGET = 12 * 1024 * 1024      # double-buffered x + out block budget


def equal_linear(x, weight, bias, *, lr_mul=1.0, activation=None):
    """Pallas implementation of EqualLinear.forward.

    x:      (..., in_dim)       leading dims flattened into M
    weight: (out_dim, in_dim)   raw parameter; equalized-lr scale applied in kernel
    bias:   (out_dim,)          raw parameter; lr_mul applied in kernel
    """
    orig_shape = x.shape
    in_dim = orig_shape[-1]
    out_dim = weight.shape[0]
    x2 = x.reshape(-1, in_dim)
    M, K, N = x2.shape[0], in_dim, out_dim
    scale = (1.0 / math.sqrt(in_dim)) * lr_mul

    # One cheap wrapper-side transpose of the (small) weight -> (K, N): the MXU
    # contraction is then plain row-major matmul, lane-dense in N.
    w_t = jnp.transpose(weight)
    b2 = bias.reshape(1, N)

    kern_args = dict(scale=scale, lr_mul=lr_mul,
                     activation=activation is not None,
                     neg_slope=0.2, act_gain=math.sqrt(2.0))

    x_item = x2.dtype.itemsize
    w_item = w_t.dtype.itemsize
    o_item = x_item
    sub = 16 if x_item < 4 else 8        # sublane rounding (bf16 packs 16 rows)

    w_resident_bytes = 2 * K * N * w_item    # weight block is double-buffered

    if w_resident_bytes <= _W_RESIDENT_BUDGET:
        # ---------- Path A: 1-D grid over M, full K, full N ----------
        tm_cap = 1024 if x_item <= 2 else 512
        tm = min(tm_cap, _round_up(M, sub))
        row_bytes = 2 * (K * x_item + N * o_item)   # dbl-buffered x + out per row
        while tm > sub and tm * row_bytes > _XO_BLOCK_BUDGET:
            tm = _round_up(tm // 2, sub)

        grid = (pl.cdiv(M, tm),)
        out = pl.pallas_call(
            functools.partial(_equal_linear_kernel_fullk, **kern_args),
            out_shape=jax.ShapeDtypeStruct((M, N), x.dtype),
            grid_spec=pltpu.PrefetchScalarGridSpec(
                num_scalar_prefetch=0,
                grid=grid,
                in_specs=[
                    pl.BlockSpec((tm, K), lambda i: (i, 0)),   # x stream
                    pl.BlockSpec((K, N), lambda i: (0, 0)),    # resident weight
                    pl.BlockSpec((1, N), lambda i: (0, 0)),    # resident bias
                ],
                out_specs=pl.BlockSpec((tm, N), lambda i: (i, 0)),
            ),
            compiler_params=pltpu.CompilerParams(
                dimension_semantics=("parallel",),
                vmem_limit_bytes=_VMEM_LIMIT_BYTES),
        )(x2, w_t, b2)
    else:
        # ---------- Path B: weight too large to keep resident ----------
        tm = min(512 if x_item > 2 else 1024, _round_up(M, sub))
        tn = 256 if N >= 256 else _round_up(N, 128)
        # Largest tk (multiple of 128, <= 512) dividing K; zero-pad K only if
        # unavoidable (K padding must be zeros for a correct accumulation).
        tk = 0
        for cand in range(min(K, 512) // 128, 0, -1):
            if K % (cand * 128) == 0:
                tk = cand * 128
                break
        if tk == 0:
            tk = min(512, _round_up(K, 128))
        Kp = _round_up(K, tk)
        if Kp != K:
            x_b = jnp.pad(x2, ((0, 0), (0, Kp - K)))
            w_b = jnp.pad(w_t, ((0, Kp - K), (0, 0)))
        else:
            x_b, w_b = x2, w_t

        grid = (pl.cdiv(M, tm), pl.cdiv(N, tn), Kp // tk)
        out = pl.pallas_call(
            functools.partial(_equal_linear_kernel_ktiled, **kern_args),
            out_shape=jax.ShapeDtypeStruct((M, N), x.dtype),
            grid_spec=pltpu.PrefetchScalarGridSpec(
                num_scalar_prefetch=0,
                grid=grid,
                in_specs=[
                    pl.BlockSpec((tm, tk), lambda i, j, k: (i, k)),
                    pl.BlockSpec((tk, tn), lambda i, j, k: (k, j)),
                    pl.BlockSpec((1, tn), lambda i, j, k: (0, j)),
                ],
                out_specs=pl.BlockSpec((tm, tn), lambda i, j, k: (i, j)),
                scratch_shapes=[pltpu.VMEM((tm, tn), jnp.float32)],
            ),
            compiler_params=pltpu.CompilerParams(
                dimension_semantics=("parallel", "parallel", "arbitrary"),
                vmem_limit_bytes=_VMEM_LIMIT_BYTES),
        )(x_b, w_b, b2)

    return out.reshape(*orig_shape[:-1], out_dim)


# ------------------------------- reference -------------------------------------

def _reference(x, weight, bias, *, lr_mul=1.0, activation=None):
    scale = (1.0 / math.sqrt(x.shape[-1])) * lr_mul
    out = x @ (weight * scale).T
    out = out + bias * lr_mul
    if activation is not None:
        out = jnp.where(out >= 0, out, out * 0.2) * math.sqrt(2.0)
    return out


if __name__ == "__main__":
    key = jax.random.PRNGKey(0)
    k_x1, k_w1, k_x2, k_w2, k_b2, k_x3, k_w3, k_b3, k_x4, k_w4, k_b4 = \
        jax.random.split(key, 11)

    # ---- Case 1: small shapes, both activation modes, lr_mul != 1, f32 ----
    batch, in_dim, out_dim = 8, 32, 16
    lr_mul = 0.01
    weight = jax.random.normal(k_w1, (out_dim, in_dim), jnp.float32) / lr_mul
    bias = jnp.full((out_dim,), 0.5, jnp.float32)
    x = jax.random.normal(k_x1, (batch, in_dim), jnp.float32)
    for act in (None, "fused_lrelu"):
        o = jax.block_until_ready(
            equal_linear(x, weight, bias, lr_mul=lr_mul, activation=act))
        r = _reference(x, weight, bias, lr_mul=lr_mul, activation=act)
        assert o.shape == r.shape
        assert jnp.allclose(o, r, atol=1e-2, rtol=1e-2), f"mismatch (small, act={act})"

    # ---- Case 2: canonical style-MLP layer, partial M edge block, f32 ----
    batch2, in_dim2, out_dim2 = 600, 512, 512      # grid over M = 2 (second partial)
    w2 = jax.random.normal(k_w2, (out_dim2, in_dim2), jnp.float32)
    b2 = jax.random.normal(k_b2, (out_dim2,), jnp.float32) * 0.1
    x2 = jax.random.normal(k_x2, (batch2, in_dim2), jnp.float32)
    o2 = jax.block_until_ready(
        equal_linear(x2, w2, b2, lr_mul=1.0, activation="fused_lrelu"))
    r2 = _reference(x2, w2, b2, lr_mul=1.0, activation="fused_lrelu")
    assert jnp.allclose(o2, r2, atol=2e-2, rtol=2e-2), "mismatch (canonical f32)"

    # ---- Case 3: bf16 operands straight into the MXU ----
    batch3, in_dim3, out_dim3 = 64, 256, 128
    w3 = jax.random.normal(k_w3, (out_dim3, in_dim3), jnp.float32)
    b3 = jax.random.normal(k_b3, (out_dim3,), jnp.float32) * 0.1
    x3 = jax.random.normal(k_x3, (batch3, in_dim3), jnp.float32)
    o3 = jax.block_until_ready(
        equal_linear(x3.astype(jnp.bfloat16), w3.astype(jnp.bfloat16),
                     b3.astype(jnp.bfloat16), lr_mul=1.0,
                     activation="fused_lrelu"))
    r3 = _reference(x3, w3, b3, lr_mul=1.0, activation="fused_lrelu")
    assert jnp.allclose(o3.astype(jnp.float32), r3, atol=1e-1, rtol=1e-1), \
        "mismatch (bf16)"

    # ---- Case 4: large weight -> K-tiled fallback path (accumulator), f32 ----
    batch4, in_dim4, out_dim4 = 16, 1024, 2048
    w4 = jax.random.normal(k_w4, (out_dim4, in_dim4), jnp.float32)
    b4 = jax.random.normal(k_b4, (out_dim4,), jnp.float32) * 0.1
    x4 = jax.random.normal(k_x4, (batch4, in_dim4), jnp.float32)
    o4 = jax.block_until_ready(
        equal_linear(x4, w4, b4, lr_mul=1.0, activation=None))
    r4 = _reference(x4, w4, b4, lr_mul=1.0, activation=None)
    assert jnp.allclose(o4, r4, atol=2e-2, rtol=2e-2), "mismatch (fallback path)"

    print("KERNEL_OK")
</pallas_src>

<mosaic_0001>
module attributes {stable_mosaic.version = 11 : i64} {
  func.func @_equal_linear_kernel_fullk(%arg0: i32, %arg1: memref<8x32xf32, #tpu.memory_space<vmem>>, %arg2: memref<32x16xf32, #tpu.memory_space<vmem>>, %arg3: memref<1x16xf32, #tpu.memory_space<vmem>>, %arg4: memref<8x16xf32, #tpu.memory_space<vmem>>) attributes {dimension_semantics = [#tpu.dimension_semantics<parallel>], iteration_bounds = array<i64: 1>, scalar_prefetch = 0 : i64, scratch_operands = 0 : i64, tpu.core_type = #tpu.core_type<tc>, window_params = [{transform_indices = @transform_0, window_bounds = array<i64: 8, 32>}, {pipeline_mode = #tpu.pipeline_mode<synchronous>, transform_indices = @transform_1, window_bounds = array<i64: 32, 16>}, {pipeline_mode = #tpu.pipeline_mode<synchronous>, transform_indices = @transform_2, window_bounds = array<i64: 1, 16>}, {transform_indices = @transform_3, window_bounds = array<i64: 8, 16>}]} {
    %c0 = arith.constant 0 : index
    %c0_0 = arith.constant 0 : index
    %0 = vector.load %arg1[%c0, %c0_0] : memref<8x32xf32, #tpu.memory_space<vmem>>, vector<8x32xf32>
    %c0_1 = arith.constant 0 : index
    %c0_2 = arith.constant 0 : index
    %1 = vector.load %arg2[%c0_1, %c0_2] : memref<32x16xf32, #tpu.memory_space<vmem>>, vector<32x16xf32>
    %cst = arith.constant dense<0.000000e+00> : vector<8x16xf32>
    %2 = tpu.matmul %0, %1, %cst {dimension_numbers = #tpu.dot_dimension_numbers<[1], [0], [0], [1], [0, 0, 1, 1], [], []>} : vector<8x32xf32>, vector<32x16xf32>, vector<8x16xf32> -> vector<8x16xf32>
    %cst_3 = arith.constant 0.00176776689 : f32
    %3 = vector.broadcast %cst_3 : f32 to vector<8x16xf32>
    %4 = arith.mulf %2, %3 : vector<8x16xf32>
    %c0_4 = arith.constant 0 : index
    %c0_5 = arith.constant 0 : index
    %5 = vector.load %arg3[%c0_4, %c0_5] : memref<1x16xf32, #tpu.memory_space<vmem>>, vector<1x16xf32>
    %cst_6 = arith.constant 0.00999999977 : f32
    %6 = vector.broadcast %cst_6 : f32 to vector<1x16xf32>
    %7 = arith.mulf %5, %6 : vector<1x16xf32>
    %8 = vector.broadcast %7 : vector<1x16xf32> to vector<8x16xf32>
    %9 = arith.addf %4, %8 : vector<8x16xf32>
    %c0_7 = arith.constant 0 : index
    %c0_8 = arith.constant 0 : index
    %10 = vector.load %arg4[%c0_7, %c0_8] : memref<8x16xf32, #tpu.memory_space<vmem>>, vector<8x16xf32>
    tpu.vector_store %arg4[%c0_7, %c0_8], %9 {strides = array<i32>} : memref<8x16xf32, #tpu.memory_space<vmem>>, vector<8x16xf32>,
    return
  }
  func.func @transform_0(%arg0: i32) -> (i32, i32) {
    %c0_i32 = arith.constant 0 : i32
    %c0_i32_0 = arith.constant 0 : i32
    return %arg0, %c0_i32 : i32, i32
  }
  func.func @transform_1(%arg0: i32) -> (i32, i32) {
    %c0_i32 = arith.constant 0 : i32
    %c0_i32_0 = arith.constant 0 : i32
    %c0_i32_1 = arith.constant 0 : i32
    return %c0_i32, %c0_i32_0 : i32, i32
  }
  func.func @transform_2(%arg0: i32) -> (i32, i32) {
    %c0_i32 = arith.constant 0 : i32
    %c0_i32_0 = arith.constant 0 : i32
    %c0_i32_1 = arith.constant 0 : i32
    return %c0_i32, %c0_i32_0 : i32, i32
  }
  func.func @transform_3(%arg0: i32) -> (i32, i32) {
    %c0_i32 = arith.constant 0 : i32
    %c0_i32_0 = arith.constant 0 : i32
    return %arg0, %c0_i32 : i32, i32
  }
}

</mosaic_0001>

<llo_original>
// kernel: tpu_custom_call.1
$region0: #{tpu_custom_call.1}
  #allocation0 [shape = 'u32[]', space=smem, size = 0x4, offset = 0x4, fixed_abs, tag = 'smem constant byte address 0x4 - core index']
  #allocation1 [shape = 'u32[144,128]{1,0:T(1,128)}', space=vmem, size = 0x12000, scoped, tag = 'internal scratch']
  %s0 = inlined_call_operand.vmem [shape: f32[8,32], index: 0, kind: input, shape index: {}]
  %s1 = inlined_call_operand.vmem [shape: f32[32,16], index: 1, kind: input, shape index: {}]
  %s2 = inlined_call_operand.vmem [shape: f32[1,16], index: 2, kind: input, shape index: {}]
  %s3 = inlined_call_operand.hbm [shape: f32[8,16], index: 3, kind: output, shape index: {}]
  %s4 = sld [smem:[#allocation0]]
  $region22: #{tpu_custom_call.1} parent=0
    _
  %s6 = ssub.s32 1, %s4
  %s7 = scalar_select 0, %s6, %s4
  $region1: #{tpu_custom_call.1} parent=0
    #allocation2 [shape = 'u8[4096]{0}', space=vmem, size = 0x1000, scoped, tag = 'output window, operand 0, single buffered']
    #allocation3 [shape = 's32[1]{0}', space=sflag, size = 0x4, scoped, tag = 'scoped memory for tpu_custom_call.1']
    %8 = vsyncpa [#allocation3], 0
    // Predicated region
    $region2: #{tpu_custom_call.1} parent=1 // pred_check
      _
    $region3: #{tpu_custom_call.1} parent=1 // pred_check_branch
      %10 = sbr.rel (0) target = $region5
    $region4: #{tpu_custom_call.1} parent=1 // pred_region
      _
    $region5: #{tpu_custom_call.1} parent=1 // pred_fallthru
      _
    // Predicated region
    $region6: #{tpu_custom_call.1} parent=1 // pred_check
      _
    $region7: #{tpu_custom_call.1} parent=1 // pred_check_branch
      %12 = sbr.rel (0) target = $region9
    $region8: #{tpu_custom_call.1} parent=1 // pred_region
      _
    $region9: #{tpu_custom_call.1} parent=1 // pred_fallthru
      _
    // Predicated region
    $region10: #{tpu_custom_call.1} parent=1 // pred_check
      _
    $region11: #{tpu_custom_call.1} parent=1 // pred_check_branch
      %14 = sbr.rel (0) target = $region13
    $region12: #{tpu_custom_call.1} parent=1 // pred_region
      _
    $region13: #{tpu_custom_call.1} parent=1 // pred_fallthru
      _
    %v15 = vld [vmem:[%s0] sm:$0xff]
    %v16 = vld [vmem:[%s1] sm:$0xff]
    %v17 = vld [vmem:[%s1 + $0x8] sm:$0xff]
    %v18 = vld [vmem:[%s1 + $0x10] sm:$0xff]
    %v19 = vld [vmem:[%s1 + $0x18] sm:$0xff]
    %vm20 = vcmask 261120
    %v22 = vsel %vm20, %v15, 0
    %24 = vmatprep.subr.mxu0 0.0
    %25 = vmatpush1.msra.mxu0 %v16
    %26 = vmatprep.subr.mxu0 0.0
    %27 = vmatpush1.msra.mxu0 %v17
    %28 = vmatprep.subr.mxu0 0.0
    %29 = vmatpush1.msra.mxu0 %v18
    %30 = vmatprep.subr.mxu0 0.0
    %31 = vmatpush1.msra.mxu0 %v19
    %32 = vmatprep.subr.mxu0 0.0
    %33 = vmatpush1.msra.mxu0 0.0
    %34 = vmatprep.subr.mxu0 0.0
    %35 = vmatpush1.msra.mxu0 0.0
    %36 = vmatprep.subr.mxu0 0.0
    %37 = vmatpush1.msra.mxu0 0.0
    %38 = vmatprep.subr.mxu0 0.0
    %39 = vmatpush1.msra.mxu0 0.0
    %40 = vmatprep.subr.mxu0 0.0
    %41 = vmatpush1.msra.mxu0 0.0
    %42 = vmatprep.subr.mxu0 0.0
    %43 = vmatpush1.msra.mxu0 0.0
    %44 = vmatprep.subr.mxu0 0.0
    %45 = vmatpush1.msra.mxu0 0.0
    %46 = vmatprep.subr.mxu0 0.0
    %47 = vmatpush1.msra.mxu0 0.0
    %48 = vmatprep.subr.mxu0 0.0
    %49 = vmatpush1.msra.mxu0 0.0
    %50 = vmatprep.subr.mxu0 0.0
    %51 = vmatpush1.msra.mxu0 0.0
    %52 = vmatprep.subr.mxu0 0.0
    %53 = vmatpush1.msra.mxu0 0.0
    %54 = vmatprep.subr.mxu0 0.0
    %55 = vmatpush1.msra.mxu0 0.0
    %56 = vmatprep.subr.mxu0 0.0
    %57 = vmatpush1.msra.mxu0 0.0
    %58 = vmatprep.subr.mxu0 0.0
    %59 = vmatpush1.msra.mxu0 0.0
    %60 = vmatprep.subr.mxu0 0.0
    %61 = vmatpush1.msra.mxu0 0.0
    %62 = vmatprep.subr.mxu0 0.0
    %63 = vmatpush1.msra.mxu0 0.0
    %64 = vmatprep.subr.mxu0 0.0
    %65 = vmatpush1.msra.mxu0 0.0
    %66 = vmatprep.subr.mxu0 0.0
    %67 = vmatpush1.msra.mxu0 0.0
    %68 = vmatprep.subr.mxu0 0.0
    %69 = vmatpush1.msra.mxu0 0.0
    %70 = vmatprep.subr.mxu0 0.0
    %71 = vmatpush1.msra.mxu0 0.0
    %72 = vmatprep.subr.mxu0 0.0
    %73 = vmatpush1.msra.mxu0 0.0
    %74 = vmatprep.subr.mxu0 0.0
    %75 = vmatpush1.msra.mxu0 0.0
    %76 = vmatprep.subr.mxu0 0.0
    %77 = vmatpush1.msra.mxu0 0.0
    %78 = vmatprep.subr.mxu0 0.0
    %79 = vmatpush1.msra.mxu0 0.0
    %80 = vmatprep.subr.mxu0 0.0
    %81 = vmatpush1.msra.mxu0 0.0
    %82 = vmatprep.subr.mxu0 0.0
    %83 = vmatpush1.msra.mxu0 0.0
    %84 = vmatprep.subr.mxu0 0.0
    %85 = vmatpush1.msra.mxu0 0.0
    %86 = vmatprep.subr.mxu0 0.0
    %87 = vmatpush1.msra.mxu0 0.0
    %88 = vmatprep.mubr.f32.mxu0 0.0
    %89 = vmatmul.mubr.f32.gmra.mrb[0].mxu0 %v22
    %v90 = vpop.f32.mrb[0].mxu0
    %v91 = vadd.f32 0.0, %v90
    %v92 = vpop.f32.mrb[0].mxu0
    %93 = vdwg.mxu0
    %v94 = vmul.f32 %v91, 0.0017677669
    %v95 = vld [vmem:[%s2] sm:$0x1]
    %v96 = vmul.f32 %v95, 0.01
    %v98 = vlaneseq
    %v99 = vshrl.u32 %v98, 7
    %v100 = vsub.s32 0, %v99
    %v101 = vrot.slane %v96, %v100
    %v103 = vadd.f32 %v94, %v101
    %vm104 = vcmask 130048
    %105 = vst.msk [vmem:[#allocation2] sm:$0xff] %vm104, %v103
    // Predicated region
    $region14: #{tpu_custom_call.1} parent=1 // pred_check
      _
    $region15: #{tpu_custom_call.1} parent=1 // pred_check_branch
      %107 = sbr.rel (0) target = $region17
    $region16: #{tpu_custom_call.1} parent=1 // pred_region
      %s109 = ssub.s32 128, 128
      %110 = vsyncadd [#allocation3], %s109
      %s112 = sshll.u32 [#allocation2], 4
      %s113 = int_to_ptr.vmem [resolvable:$true] %s112
      %115 = dma.vmem_to_hbm [thread:$0]  %s113, 128, %s3, [#allocation3]
    $region17: #{tpu_custom_call.1} parent=1 // pred_fallthru
      _
    // Predicated region
    $region18: #{tpu_custom_call.1} parent=1 // pred_check
      _
    $region19: #{tpu_custom_call.1} parent=1 // pred_check_branch
      %117 = sbr.rel (0) target = $region21
    $region20: #{tpu_custom_call.1} parent=1 // pred_region
      %118 = dma.done [#allocation3], 128
    $region21: #{tpu_custom_call.1} parent=1 // pred_fallthru
      _
    %119 = vsyncpa [#allocation3], 1

</llo_original>
